<compile_context>
chip_gen: v7x
topology: tpu7x:2x2x1
jax: 0.10.0
libtpu: 0.0.40
codegen_flags: <defaults>
</compile_context>

<pallas_src>
import jax
import jax.numpy as jnp
from jax.experimental import pallas as pl
from jax.experimental.pallas import tpu as pltpu

HIDDEN_PAD = 128           # lane-dense padded hidden width
DEFAULT_TILE_B = 4096      # batch rows per grid step


def _round_up(n, m):
    return ((n + m - 1) // m) * m


def _pick_tile_b(B, in_f, tile_b):
    """Pick the batch tile: big (amortize per-step overhead), multiple of 128
    (clean transposes / lane-dense stores), >= 2 grid steps when the batch
    allows (v7x has 2 TensorCores), and VMEM-safe for large feature dims."""
    half = _round_up(max(1, (B + 1) // 2), 128)
    # rough per-row VMEM bytes: double-buffered f32 x tile + bf16 copy
    # + f32/bf16 (tb, 128) intermediates (h1, h2, s, sT, casts)
    per_row_bytes = 10 * in_f + 18 * HIDDEN_PAD
    cap = max(128, ((16 * 1024 * 1024) // per_row_bytes) // 128 * 128)
    return max(128, min(tile_b, half, cap))


def mlp_value_kernel(x_ref, w1_ref, b1_ref, w2_ref, b2_ref, w3_ref, b3_ref, o_ref):
    """Fused 3-layer MLP on one batch tile.

    x_ref: (TB, IN) f32     w1_ref: (IN, 128) bf16   b1_ref: (1, 128) f32
    w2_ref: (128,128) bf16  b2_ref: (1, 128) f32
    w3_ref: (1, 128) f32 (row vector)                b3_ref: (1, 1) f32
    o_ref:  (1, 1, TB) f32  (batch rows along lanes -> unmasked wide stores)
    """
    # Layer 1: cast the f32 x tile to bf16 on the VPU, MXU matmul, f32 acc.
    x = x_ref[...].astype(jnp.bfloat16)
    h1 = jnp.dot(x, w1_ref[...], preferred_element_type=jnp.float32)
    h1 = jnp.maximum(h1 + b1_ref[...], 0.0)

    # Layer 2: bf16 MXU matmul, f32 accumulate; bias + ReLU in f32 on the VPU.
    h2 = jnp.dot(h1.astype(jnp.bfloat16), w2_ref[...],
                 preferred_element_type=jnp.float32)
    h2 = jnp.maximum(h2 + b2_ref[...], 0.0)            # (TB, 128) f32

    # Layer 3 (128 -> 1): weight on the VPU, then XLU transpose so batch rows
    # land on lanes, and a sublane reduce over the hidden dim -> (1, TB) row.
    s = h2 * w3_ref[...]                                 # (TB, 128)
    s_t = s.T                                            # (128, TB), XLU
    row = jnp.sum(s_t, axis=0, keepdims=True) + b3_ref[...]   # (1, TB)
    o_ref[...] = row.reshape(o_ref.shape).astype(o_ref.dtype)


def init_params(key, input_size, hidden_dims=(64, 64), output_size=1):
    """PyTorch nn.Linear-style init: U(-1/sqrt(fan_in), 1/sqrt(fan_in)).

    Weights stored (in, out) so the forward is x @ W + b.
    """
    dims = [input_size] + list(hidden_dims) + [output_size]
    params = {}
    for i in range(len(dims) - 1):
        fan_in, fan_out = dims[i], dims[i + 1]
        key, kw, kb = jax.random.split(key, 3)
        bound = 1.0 / (fan_in ** 0.5)
        params[f"w{i + 1}"] = jax.random.uniform(
            kw, (fan_in, fan_out), jnp.float32, -bound, bound)
        params[f"b{i + 1}"] = jax.random.uniform(
            kb, (1, fan_out), jnp.float32, -bound, bound)
    return params


def pack_params(params):
    """Zero-pad hidden width 64 -> 128 and cast MXU weights to bf16.

    Padding is exact: padded h1/h2 lanes are relu(0 + 0) = 0 and padded W rows
    are 0, so they contribute nothing downstream.
    """
    w1, b1 = params["w1"], params["b1"]            # (in, 64), (1, 64)
    w2, b2 = params["w2"], params["b2"]            # (64, 64), (1, 64)
    w3, b3 = params["w3"], params["b3"]            # (64, 1),  (1, 1)
    in_f, h1 = w1.shape
    h2 = w2.shape[1]
    H = HIDDEN_PAD

    w1p = jnp.zeros((in_f, H), jnp.float32).at[:, :h1].set(w1)
    b1p = jnp.zeros((1, H), jnp.float32).at[:, :h1].set(b1)
    w2p = jnp.zeros((H, H), jnp.float32).at[:h1, :h2].set(w2)
    b2p = jnp.zeros((1, H), jnp.float32).at[:, :h2].set(b2)
    w3p = jnp.zeros((1, H), jnp.float32).at[:, :h2].set(w3[:, 0])  # row vector

    return {
        "w1": w1p.astype(jnp.bfloat16),
        "b1": b1p,
        "w2": w2p.astype(jnp.bfloat16),
        "b2": b2p,
        "w3": w3p,                     # f32, used on VPU in the kernel
        "b3": b3.astype(jnp.float32),  # (1, 1)
    }


def v_forward(x, packed, *, tile_b=DEFAULT_TILE_B):
    """Fused value-network forward.  x: (B, input_size) f32 -> (B, 1) f32."""
    B, in_f = x.shape
    H = packed["w1"].shape[1]

    tb = _pick_tile_b(B, in_f, tile_b)
    # Only tiny batches (B < one tile) get zero-padded; for larger B the last
    # grid step just reads a partial x block (garbage tail rows are sliced off).
    xs = x if B >= tb else jnp.pad(x, ((0, tb - B), (0, 0)))
    grid_b = (max(B, tb) + tb - 1) // tb

    const2 = lambda i: (0, 0)   # weights/biases resident across grid steps

    rows = grid_b * tb
    weight_bytes = (in_f * H + H * H) * 2 + (3 * H + 1) * 4
    cost = pl.CostEstimate(
        flops=2 * rows * (in_f * H + H * H + H),
        transcendentals=0,
        bytes_accessed=rows * in_f * 4 + rows * 4 + weight_bytes,
    )

    out = pl.pallas_call(
        mlp_value_kernel,
        out_shape=jax.ShapeDtypeStruct((grid_b, 1, tb), jnp.float32),
        grid=(grid_b,),
        in_specs=[
            pl.BlockSpec((tb, in_f), lambda i: (i, 0)),   # x tile streams (f32)
            pl.BlockSpec((in_f, H), const2),              # W1 (resident)
            pl.BlockSpec((1, H), const2),                 # b1
            pl.BlockSpec((H, H), const2),                 # W2
            pl.BlockSpec((1, H), const2),                 # b2
            pl.BlockSpec((1, H), const2),                 # w3 row
            pl.BlockSpec((1, 1), const2),                 # b3
        ],
        out_specs=pl.BlockSpec((1, 1, tb), lambda i: (i, 0, 0)),
        compiler_params=pltpu.CompilerParams(
            dimension_semantics=("parallel",),            # shard over 2 TCs (v7x)
            vmem_limit_bytes=32 * 1024 * 1024,            # safe on v5e/v6e/v7x
        ),
        cost_estimate=cost,
    )(xs, packed["w1"], packed["b1"], packed["w2"], packed["b2"],
      packed["w3"], packed["b3"])

    # Lane-dense (grid, 1, tb) slab -> (B, 1); rows >= B are padding/garbage.
    return out.reshape(-1)[:B][:, None]


def v_forward_ref_f32(x, params):
    """Pure f32 reference matching the PyTorch module exactly."""
    h = jnp.maximum(x @ params["w1"] + params["b1"], 0.0)
    h = jnp.maximum(h @ params["w2"] + params["b2"], 0.0)
    return h @ params["w3"] + params["b3"]


def v_forward_ref_bf16(x, params):
    """Reference mirroring the kernel's bf16 rounding (tight-tolerance check)."""
    rt = lambda a: a.astype(jnp.bfloat16).astype(jnp.float32)
    h = jnp.maximum(rt(x) @ rt(params["w1"]) + params["b1"], 0.0)
    h = jnp.maximum(rt(h) @ rt(params["w2"]) + params["b2"], 0.0)
    return h @ params["w3"] + params["b3"]


if __name__ == "__main__":
    key = jax.random.PRNGKey(0)
    key, kx, kx2 = jax.random.split(key, 3)

    batch, input_size = 8, 32
    params = init_params(key, input_size, hidden_dims=(64, 64), output_size=1)
    packed = pack_params(params)

    # Main test: small batch (pads up to one 128-row tile).
    x = jax.random.normal(kx, (batch, input_size), jnp.float32)
    out = jax.block_until_ready(v_forward(x, packed))
    assert out.shape == (batch, 1)
    assert jnp.allclose(out, v_forward_ref_bf16(x, params), atol=5e-3, rtol=5e-3)
    assert jnp.allclose(out, v_forward_ref_f32(x, params), atol=5e-2, rtol=5e-2)

    # Multi-step grid + partial last block (no whole-batch padding path).
    x2 = jax.random.normal(kx2, (300, input_size), jnp.float32)
    out2 = jax.block_until_ready(v_forward(x2, packed))
    assert out2.shape == (300, 1)
    assert jnp.allclose(out2, v_forward_ref_bf16(x2, params), atol=5e-3, rtol=5e-3)

    print("KERNEL_OK")
</pallas_src>

<mosaic_0001>
module attributes {stable_mosaic.version = 11 : i64} {
  func.func @mlp_value_kernel(%arg0: i32, %arg1: memref<128x32xf32, #tpu.memory_space<vmem>>, %arg2: memref<32x128xbf16, #tpu.memory_space<vmem>>, %arg3: memref<1x128xf32, #tpu.memory_space<vmem>>, %arg4: memref<128x128xbf16, #tpu.memory_space<vmem>>, %arg5: memref<1x128xf32, #tpu.memory_space<vmem>>, %arg6: memref<1x128xf32, #tpu.memory_space<vmem>>, %arg7: memref<1x1xf32, #tpu.memory_space<vmem>>, %arg8: memref<1x1x128xf32, #tpu.memory_space<vmem>>) attributes {dimension_semantics = [#tpu.dimension_semantics<parallel>], iteration_bounds = array<i64: 1>, scalar_prefetch = 0 : i64, scratch_operands = 0 : i64, tpu.core_type = #tpu.core_type<tc>, window_params = [{transform_indices = @transform_0, window_bounds = array<i64: 128, 32>}, {pipeline_mode = #tpu.pipeline_mode<synchronous>, transform_indices = @transform_1, window_bounds = array<i64: 32, 128>}, {pipeline_mode = #tpu.pipeline_mode<synchronous>, transform_indices = @transform_2, window_bounds = array<i64: 1, 128>}, {pipeline_mode = #tpu.pipeline_mode<synchronous>, transform_indices = @transform_3, window_bounds = array<i64: 128, 128>}, {pipeline_mode = #tpu.pipeline_mode<synchronous>, transform_indices = @transform_4, window_bounds = array<i64: 1, 128>}, {pipeline_mode = #tpu.pipeline_mode<synchronous>, transform_indices = @transform_5, window_bounds = array<i64: 1, 128>}, {pipeline_mode = #tpu.pipeline_mode<synchronous>, transform_indices = @transform_6, window_bounds = array<i64: 1, 1>}, {transform_indices = @transform_7, window_bounds = array<i64: 1, 1, 128>}]} {
    %c0 = arith.constant 0 : index
    %c0_0 = arith.constant 0 : index
    %0 = vector.load %arg1[%c0, %c0_0] : memref<128x32xf32, #tpu.memory_space<vmem>>, vector<128x32xf32>
    %1 = arith.truncf %0 : vector<128x32xf32> to vector<128x32xbf16>
    %c0_1 = arith.constant 0 : index
    %c0_2 = arith.constant 0 : index
    %2 = vector.load %arg2[%c0_1, %c0_2] : memref<32x128xbf16, #tpu.memory_space<vmem>>, vector<32x128xbf16>
    %cst = arith.constant dense<0.000000e+00> : vector<128x128xf32>
    %3 = tpu.matmul %1, %2, %cst {dimension_numbers = #tpu.dot_dimension_numbers<[1], [0], [0], [1], [0, 0, 1, 1], [], []>} : vector<128x32xbf16>, vector<32x128xbf16>, vector<128x128xf32> -> vector<128x128xf32>
    %c0_3 = arith.constant 0 : index
    %c0_4 = arith.constant 0 : index
    %4 = vector.load %arg3[%c0_3, %c0_4] : memref<1x128xf32, #tpu.memory_space<vmem>>, vector<1x128xf32>
    %5 = vector.broadcast %4 : vector<1x128xf32> to vector<128x128xf32>
    %6 = arith.addf %3, %5 : vector<128x128xf32>
    %cst_5 = arith.constant 0.000000e+00 : f32
    %7 = vector.broadcast %cst_5 : f32 to vector<128x128xf32>
    %8 = arith.maximumf %6, %7 : vector<128x128xf32>
    %9 = arith.truncf %8 : vector<128x128xf32> to vector<128x128xbf16>
    %c0_6 = arith.constant 0 : index
    %c0_7 = arith.constant 0 : index
    %10 = vector.load %arg4[%c0_6, %c0_7] : memref<128x128xbf16, #tpu.memory_space<vmem>>, vector<128x128xbf16>
    %cst_8 = arith.constant dense<0.000000e+00> : vector<128x128xf32>
    %11 = tpu.matmul %9, %10, %cst_8 {dimension_numbers = #tpu.dot_dimension_numbers<[1], [0], [0], [1], [0, 0, 1, 1], [], []>} : vector<128x128xbf16>, vector<128x128xbf16>, vector<128x128xf32> -> vector<128x128xf32>
    %c0_9 = arith.constant 0 : index
    %c0_10 = arith.constant 0 : index
    %12 = vector.load %arg5[%c0_9, %c0_10] : memref<1x128xf32, #tpu.memory_space<vmem>>, vector<1x128xf32>
    %13 = vector.broadcast %12 : vector<1x128xf32> to vector<128x128xf32>
    %14 = arith.addf %11, %13 : vector<128x128xf32>
    %cst_11 = arith.constant 0.000000e+00 : f32
    %15 = vector.broadcast %cst_11 : f32 to vector<128x128xf32>
    %16 = arith.maximumf %14, %15 : vector<128x128xf32>
    %c0_12 = arith.constant 0 : index
    %c0_13 = arith.constant 0 : index
    %17 = vector.load %arg6[%c0_12, %c0_13] : memref<1x128xf32, #tpu.memory_space<vmem>>, vector<1x128xf32>
    %18 = vector.broadcast %17 : vector<1x128xf32> to vector<128x128xf32>
    %19 = arith.mulf %16, %18 : vector<128x128xf32>
    %20 = tpu.transpose %19, [1, 0] : vector<128x128xf32> -> vector<128x128xf32>
    %cst_14 = arith.constant dense<0.000000e+00> : vector<128xf32>
    %21 = vector.multi_reduction <add>, %20, %cst_14 [0] : vector<128x128xf32> to vector<128xf32>
    %22 = vector.shape_cast %21 : vector<128xf32> to vector<1x128xf32>
    %c0_15 = arith.constant 0 : index
    %c0_16 = arith.constant 0 : index
    %23 = vector.load %arg7[%c0_15, %c0_16] : memref<1x1xf32, #tpu.memory_space<vmem>>, vector<1x1xf32>
    %24 = vector.broadcast %23 : vector<1x1xf32> to vector<1x128xf32>
    %25 = arith.addf %22, %24 : vector<1x128xf32>
    %26 = vector.shape_cast %25 : vector<1x128xf32> to vector<1x1x128xf32>
    %c0_17 = arith.constant 0 : index
    %c0_18 = arith.constant 0 : index
    %c0_19 = arith.constant 0 : index
    %27 = vector.load %arg8[%c0_17, %c0_18, %c0_19] : memref<1x1x128xf32, #tpu.memory_space<vmem>>, vector<1x1x128xf32>
    tpu.vector_store %arg8[%c0_17, %c0_18, %c0_19], %26 {strides = array<i32>} : memref<1x1x128xf32, #tpu.memory_space<vmem>>, vector<1x1x128xf32>,
    return
  }
  func.func @transform_0(%arg0: i32) -> (i32, i32) {
    %c0_i32 = arith.constant 0 : i32
    %c0_i32_0 = arith.constant 0 : i32
    return %arg0, %c0_i32 : i32, i32
  }
  func.func @transform_1(%arg0: i32) -> (i32, i32) {
    %c0_i32 = arith.constant 0 : i32
    %c0_i32_0 = arith.constant 0 : i32
    %c0_i32_1 = arith.constant 0 : i32
    return %c0_i32, %c0_i32_0 : i32, i32
  }
  func.func @transform_2(%arg0: i32) -> (i32, i32) {
    %c0_i32 = arith.constant 0 : i32
    %c0_i32_0 = arith.constant 0 : i32
    %c0_i32_1 = arith.constant 0 : i32
    return %c0_i32, %c0_i32_0 : i32, i32
  }
  func.func @transform_3(%arg0: i32) -> (i32, i32) {
    %c0_i32 = arith.constant 0 : i32
    %c0_i32_0 = arith.constant 0 : i32
    %c0_i32_1 = arith.constant 0 : i32
    return %c0_i32, %c0_i32_0 : i32, i32
  }
  func.func @transform_4(%arg0: i32) -> (i32, i32) {
    %c0_i32 = arith.constant 0 : i32
    %c0_i32_0 = arith.constant 0 : i32
    %c0_i32_1 = arith.constant 0 : i32
    return %c0_i32, %c0_i32_0 : i32, i32
  }
  func.func @transform_5(%arg0: i32) -> (i32, i32) {
    %c0_i32 = arith.constant 0 : i32
    %c0_i32_0 = arith.constant 0 : i32
    %c0_i32_1 = arith.constant 0 : i32
    return %c0_i32, %c0_i32_0 : i32, i32
  }
  func.func @transform_6(%arg0: i32) -> (i32, i32) {
    %c0_i32 = arith.constant 0 : i32
    %c0_i32_0 = arith.constant 0 : i32
    %c0_i32_1 = arith.constant 0 : i32
    return %c0_i32, %c0_i32_0 : i32, i32
  }
  func.func @transform_7(%arg0: i32) -> (i32, i32, i32) {
    %c0_i32 = arith.constant 0 : i32
    %c0_i32_0 = arith.constant 0 : i32
    %c0_i32_1 = arith.constant 0 : i32
    return %arg0, %c0_i32, %c0_i32_0 : i32, i32, i32
  }
}

</mosaic_0001>

<llo_original>
// kernel: tpu_custom_call.1
$region0: #{tpu_custom_call.1}
  #allocation0 [shape = 'u32[]', space=smem, size = 0x4, offset = 0x4, fixed_abs, tag = 'smem constant byte address 0x4 - core index']
  #allocation1 [shape = 'u32[144,128]{1,0:T(1,128)}', space=vmem, size = 0x12000, scoped, tag = 'internal scratch']
  #allocation2 [shape = 'f32[1,1]{1,0:T(1,128)S(1)}', space=vmem, size = 0x200, scoped, tag = 'scoped memory for tpu_custom_call.1']
  %s0 = inlined_call_operand.vmem [shape: f32[128,32], index: 0, kind: input, shape index: {}]
  %s1 = inlined_call_operand.vmem [shape: bf16[32,128], index: 1, kind: input, shape index: {}]
  %s2 = inlined_call_operand.vmem [shape: f32[1,128], index: 2, kind: input, shape index: {}]
  %s3 = inlined_call_operand.vmem [shape: bf16[128,128], index: 3, kind: input, shape index: {}]
  %s4 = inlined_call_operand.vmem [shape: f32[1,128], index: 4, kind: input, shape index: {}]
  %s5 = inlined_call_operand.vmem [shape: f32[1,128], index: 5, kind: input, shape index: {}]
  %s6 = inlined_call_operand.<no memory space> [shape: f32[1,1], index: 6, kind: input, shape index: {}]
  %s7 = inlined_call_operand.hbm [shape: f32[1,1,128], index: 7, kind: output, shape index: {}]
  %s8 = sld [smem:[#allocation0]]
  $region38: #{tpu_custom_call.1} parent=0
    _
  %s10 = ssub.s32 1, %s8
  %s11 = scalar_select 0, %s10, %s8
  %v12 = vstv %s6
  %13 = vst [vmem:[#allocation2] sm:$0x1] %v12
  $region1: #{tpu_custom_call.1} parent=0
    #allocation3 [shape = 'u8[512]{0}', space=vmem, size = 0x400, scoped, tag = 'output window, operand 0, single buffered']
    #allocation4 [shape = 's32[1]{0}', space=sflag, size = 0x4, scoped, tag = 'scoped memory for tpu_custom_call.1']
    %14 = vsyncpa [#allocation4], 0
    // Predicated region
    $region2: #{tpu_custom_call.1} parent=1 // pred_check
      _
    $region3: #{tpu_custom_call.1} parent=1 // pred_check_branch
      %16 = sbr.rel (0) target = $region5
    $region4: #{tpu_custom_call.1} parent=1 // pred_region
      _
    $region5: #{tpu_custom_call.1} parent=1 // pred_fallthru
      _
    // Predicated region
    $region6: #{tpu_custom_call.1} parent=1 // pred_check
      _
    $region7: #{tpu_custom_call.1} parent=1 // pred_check_branch
      %18 = sbr.rel (0) target = $region9
    $region8: #{tpu_custom_call.1} parent=1 // pred_region
      _
    $region9: #{tpu_custom_call.1} parent=1 // pred_fallthru
      _
    // Predicated region
    $region10: #{tpu_custom_call.1} parent=1 // pred_check
      _
    $region11: #{tpu_custom_call.1} parent=1 // pred_check_branch
      %20 = sbr.rel (0) target = $region13
    $region12: #{tpu_custom_call.1} parent=1 // pred_region
      _
    $region13: #{tpu_custom_call.1} parent=1 // pred_fallthru
      _
    // Predicated region
    $region14: #{tpu_custom_call.1} parent=1 // pred_check
      _
    $region15: #{tpu_custom_call.1} parent=1 // pred_check_branch
      %22 = sbr.rel (0) target = $region17
    $region16: #{tpu_custom_call.1} parent=1 // pred_region
      _
    $region17: #{tpu_custom_call.1} parent=1 // pred_fallthru
      _
    // Predicated region
    $region18: #{tpu_custom_call.1} parent=1 // pred_check
      _
    $region19: #{tpu_custom_call.1} parent=1 // pred_check_branch
      %24 = sbr.rel (0) target = $region21
    $region20: #{tpu_custom_call.1} parent=1 // pred_region
      _
    $region21: #{tpu_custom_call.1} parent=1 // pred_fallthru
      _
    // Predicated region
    $region22: #{tpu_custom_call.1} parent=1 // pred_check
      _
    $region23: #{tpu_custom_call.1} parent=1 // pred_check_branch
      %26 = sbr.rel (0) target = $region25
    $region24: #{tpu_custom_call.1} parent=1 // pred_region
      _
    $region25: #{tpu_custom_call.1} parent=1 // pred_fallthru
      _
    // Predicated region
    $region26: #{tpu_custom_call.1} parent=1 // pred_check
      _
    $region27: #{tpu_custom_call.1} parent=1 // pred_check_branch
      %28 = sbr.rel (0) target = $region29
    $region28: #{tpu_custom_call.1} parent=1 // pred_region
      _
    $region29: #{tpu_custom_call.1} parent=1 // pred_fallthru
      _
    %v30 = vld [vmem:[%s0] sm:$0xff]
    %v31 = vld [vmem:[%s0 + $0x8] sm:$0xff]
    %v32 = vld [vmem:[%s0 + $0x10] sm:$0xff]
    %v33 = vld [vmem:[%s0 + $0x18] sm:$0xff]
    %v34 = vld [vmem:[%s0 + $0x20] sm:$0xff]
    %v35 = vld [vmem:[%s0 + $0x28] sm:$0xff]
    %v36 = vld [vmem:[%s0 + $0x30] sm:$0xff]
    %v37 = vld [vmem:[%s0 + $0x38] sm:$0xff]
    %v38 = vld [vmem:[%s0 + $0x40] sm:$0xff]
    %v39 = vld [vmem:[%s0 + $0x48] sm:$0xff]
    %v40 = vld [vmem:[%s0 + $0x50] sm:$0xff]
    %v41 = vld [vmem:[%s0 + $0x58] sm:$0xff]
    %v42 = vld [vmem:[%s0 + $0x60] sm:$0xff]
    %v43 = vld [vmem:[%s0 + $0x68] sm:$0xff]
    %v44 = vld [vmem:[%s0 + $0x70] sm:$0xff]
    %v45 = vld [vmem:[%s0 + $0x78] sm:$0xff]
    %v46 = vpack.c.bf16 %v31, %v30
    %v47 = vpack.c.bf16 %v33, %v32
    %v48 = vpack.c.bf16 %v35, %v34
    %v49 = vpack.c.bf16 %v37, %v36
    %v50 = vpack.c.bf16 %v39, %v38
    %v51 = vpack.c.bf16 %v41, %v40
    %v52 = vpack.c.bf16 %v43, %v42
    %v53 = vpack.c.bf16 %v45, %v44
    %v54 = vld [vmem:[%s1] sm:$0xf]
    %v55 = vld [vmem:[%s1 + $0x4] sm:$0xf]
    %v56 = vld [vmem:[%s1 + $0x8] sm:$0xf]
    %v57 = vld [vmem:[%s1 + $0xc] sm:$0xf]
    %v58 = vld [vmem:[%s2] sm:$0x1]
    %v60 = vlaneseq
    %v61 = vshrl.u32 %v60, 7
    %v62 = vsub.s32 0, %v61
    %v63 = vrot.slane %v58, %v62
    %v69 = vunpack.c.l.b16 %v54
    %v70 = vunpack.c.l.b16 %v55
    %v71 = vunpack.c.l.b16 %v56
    %v72 = vunpack.c.l.b16 %v57
    %v73 = vpack.c.b16 %v70, %v69
    %v74 = vpack.c.b16 %v72, %v71
    %vm77 = vcmask 261120
    %v79 = vsel %vm77, %v46, 0
    %v82 = vsel %vm77, %v47, 0
    %v85 = vsel %vm77, %v48, 0
    %v88 = vsel %vm77, %v49, 0
    %v91 = vsel %vm77, %v50, 0
    %v94 = vsel %vm77, %v51, 0
    %v97 = vsel %vm77, %v52, 0
    %v100 = vsel %vm77, %v53, 0
    %102 = vmatprep.subr.bf16.mxu0 0
    %103 = vmatpush1.bf16.msra.mxu0 %v73
    %104 = vmatprep.subr.bf16.mxu0 0
    %105 = vmatpush1.bf16.msra.mxu0 %v74
    %106 = vmatprep.subr.bf16.mxu0 0
    %107 = vmatpush1.bf16.msra.mxu0 0
    %108 = vmatprep.subr.bf16.mxu0 0
    %109 = vmatpush1.bf16.msra.mxu0 0
    %110 = vmatprep.subr.bf16.mxu0 0
    %111 = vmatpush1.bf16.msra.mxu0 0
    %112 = vmatprep.subr.bf16.mxu0 0
    %113 = vmatpush1.bf16.msra.mxu0 0
    %114 = vmatprep.subr.bf16.mxu0 0
    %115 = vmatpush1.bf16.msra.mxu0 0
    %116 = vmatprep.subr.bf16.mxu0 0
    %117 = vmatpush1.bf16.msra.mxu0 0
    %118 = vmatprep.subr.bf16.mxu0 0
    %119 = vmatpush1.bf16.msra.mxu0 0
    %120 = vmatprep.subr.bf16.mxu0 0
    %121 = vmatpush1.bf16.msra.mxu0 0
    %122 = vmatprep.subr.bf16.mxu0 0
    %123 = vmatpush1.bf16.msra.mxu0 0
    %124 = vmatprep.subr.bf16.mxu0 0
    %125 = vmatpush1.bf16.msra.mxu0 0
    %126 = vmatprep.subr.bf16.mxu0 0
    %127 = vmatpush1.bf16.msra.mxu0 0
    %128 = vmatprep.subr.bf16.mxu0 0
    %129 = vmatpush1.bf16.msra.mxu0 0
    %130 = vmatprep.subr.bf16.mxu0 0
    %131 = vmatpush1.bf16.msra.mxu0 0
    %132 = vmatprep.subr.bf16.mxu0 0
    %133 = vmatpush1.bf16.msra.mxu0 0
    %134 = vmatprep.mubr.bf16.mxu0 0
    %135 = vmatmul.mubr.bf16.gmra.mrb[0].mxu0 %v79
    %v136 = vpop.f32.mrb[0].mxu0
    %v137 = vadd.f32 %v63, %v136
    %v138 = vpop.f32.mrb[0].mxu0
    %v139 = vpop.f32.mrb[0].mxu0
    %v140 = vadd.f32 %v63, %v139
    %v141 = vpop.f32.mrb[0].mxu0
    %142 = vmatprep.mubr.bf16.mxu0 0
    %143 = vmatmul.mubr.bf16.gmra.mrb[0].mxu0 %v82
    %v144 = vpop.f32.mrb[0].mxu0
    %v145 = vadd.f32 %v63, %v144
    %v146 = vpop.f32.mrb[0].mxu0
    %v147 = vpop.f32.mrb[0].mxu0
    %v148 = vadd.f32 %v63, %v147
    %v149 = vpop.f32.mrb[0].mxu0
    %150 = vmatprep.mubr.bf16.mxu0 0
    %151 = vmatmul.mubr.bf16.gmra.mrb[0].mxu0 %v85
    %v152 = vpop.f32.mrb[0].mxu0
    %v153 = vadd.f32 %v63, %v152
    %v154 = vpop.f32.mrb[0].mxu0
    %v155 = vpop.f32.mrb[0].mxu0
    %v156 = vadd.f32 %v63, %v155
    %v157 = vpop.f32.mrb[0].mxu0
    %158 = vmatprep.mubr.bf16.mxu0 0
    %159 = vmatmul.mubr.bf16.gmra.mrb[0].mxu0 %v88
    %v160 = vpop.f32.mrb[0].mxu0
    %v161 = vadd.f32 %v63, %v160
    %v162 = vpop.f32.mrb[0].mxu0
    %v163 = vpop.f32.mrb[0].mxu0
    %v164 = vadd.f32 %v63, %v163
    %v165 = vpop.f32.mrb[0].mxu0
    %166 = vmatprep.mubr.bf16.mxu0 0
    %167 = vmatmul.mubr.bf16.gmra.mrb[0].mxu0 %v91
    %v168 = vpop.f32.mrb[0].mxu0
    %v169 = vadd.f32 %v63, %v168
    %v170 = vpop.f32.mrb[0].mxu0
    %v171 = vpop.f32.mrb[0].mxu0
    %v172 = vadd.f32 %v63, %v171
    %v173 = vpop.f32.mrb[0].mxu0
    %174 = vmatprep.mubr.bf16.mxu0 0
    %175 = vmatmul.mubr.bf16.gmra.mrb[0].mxu0 %v94
    %v176 = vpop.f32.mrb[0].mxu0
    %v177 = vadd.f32 %v63, %v176
    %v178 = vpop.f32.mrb[0].mxu0
    %v179 = vpop.f32.mrb[0].mxu0
    %v180 = vadd.f32 %v63, %v179
    %v181 = vpop.f32.mrb[0].mxu0
    %182 = vmatprep.mubr.bf16.mxu0 0
    %183 = vmatmul.mubr.bf16.gmra.mrb[0].mxu0 %v97
    %v184 = vpop.f32.mrb[0].mxu0
    %v185 = vadd.f32 %v63, %v184
    %v186 = vpop.f32.mrb[0].mxu0
    %v187 = vpop.f32.mrb[0].mxu0
    %v188 = vadd.f32 %v63, %v187
    %v189 = vpop.f32.mrb[0].mxu0
    %190 = vmatprep.mubr.bf16.mxu0 0
    %191 = vmatmul.mubr.bf16.gmra.mrb[0].mxu0 %v100
    %v192 = vpop.f32.mrb[0].mxu0
    %v193 = vadd.f32 %v63, %v192
    %v194 = vpop.f32.mrb[0].mxu0
    %v195 = vpop.f32.mrb[0].mxu0
    %v196 = vadd.f32 %v63, %v195
    %v197 = vpop.f32.mrb[0].mxu0
    %198 = vdwg.mxu0
    %v199 = vmax.f32 %v137, 0.0
    %v200 = vmax.f32 %v140, 0.0
    %v201 = vmax.f32 %v145, 0.0
    %v202 = vmax.f32 %v148, 0.0
    %v203 = vmax.f32 %v153, 0.0
    %v204 = vmax.f32 %v156, 0.0
    %v205 = vmax.f32 %v161, 0.0
    %v206 = vmax.f32 %v164, 0.0
    %v207 = vmax.f32 %v169, 0.0
    %v208 = vmax.f32 %v172, 0.0
    %v209 = vmax.f32 %v177, 0.0
    %v210 = vmax.f32 %v180, 0.0
    %v211 = vmax.f32 %v185, 0.0
    %v212 = vmax.f32 %v188, 0.0
    %v213 = vmax.f32 %v193, 0.0
    %v214 = vmax.f32 %v196, 0.0
    %v215 = vpack.c.bf16 %v200, %v199
    %v216 = vpack.c.bf16 %v202, %v201
    %v217 = vpack.c.bf16 %v204, %v203
    %v218 = vpack.c.bf16 %v206, %v205
    %v219 = vpack.c.bf16 %v208, %v207
    %v220 = vpack.c.bf16 %v210, %v209
    %v221 = vpack.c.bf16 %v212, %v211
    %v222 = vpack.c.bf16 %v214, %v213
    %v223 = vld [vmem:[%s3] sm:$0xf]
    %v224 = vld [vmem:[%s3 + $0x4] sm:$0xf]
    %v225 = vld [vmem:[%s3 + $0x8] sm:$0xf]
    %v226 = vld [vmem:[%s3 + $0xc] sm:$0xf]
    %v227 = vld [vmem:[%s3 + $0x10] sm:$0xf]
    %v228 = vld [vmem:[%s3 + $0x14] sm:$0xf]
    %v229 = vld [vmem:[%s3 + $0x18] sm:$0xf]
    %v230 = vld [vmem:[%s3 + $0x1c] sm:$0xf]
    %v231 = vld [vmem:[%s3 + $0x20] sm:$0xf]
    %v232 = vld [vmem:[%s3 + $0x24] sm:$0xf]
    %v233 = vld [vmem:[%s3 + $0x28] sm:$0xf]
    %v234 = vld [vmem:[%s3 + $0x2c] sm:$0xf]
    %v235 = vld [vmem:[%s3 + $0x30] sm:$0xf]
    %v236 = vld [vmem:[%s3 + $0x34] sm:$0xf]
    %v237 = vld [vmem:[%s3 + $0x38] sm:$0xf]
    %v238 = vld [vmem:[%s3 + $0x3c] sm:$0xf]
    %v239 = vld [vmem:[%s4] sm:$0x1]
    %v241 = vlaneseq
    %v242 = vshrl.u32 %v241, 7
    %v243 = vsub.s32 0, %v242
    %v244 = vrot.slane %v239, %v243
    %v262 = vunpack.c.l.b16 %v223
    %v263 = vunpack.c.l.b16 %v224
    %v264 = vunpack.c.l.b16 %v225
    %v265 = vunpack.c.l.b16 %v226
    %v266 = vunpack.c.l.b16 %v227
    %v267 = vunpack.c.l.b16 %v228
    %v268 = vunpack.c.l.b16 %v229
    %v269 = vunpack.c.l.b16 %v230
    %v270 = vunpack.c.l.b16 %v231
    %v271 = vunpack.c.l.b16 %v232
    %v272 = vunpack.c.l.b16 %v233
    %v273 = vunpack.c.l.b16 %v234
    %v274 = vunpack.c.l.b16 %v235
    %v275 = vunpack.c.l.b16 %v236
    %v276 = vunpack.c.l.b16 %v237
    %v277 = vunpack.c.l.b16 %v238
    %v278 = vpack.c.b16 %v263, %v262
    %v279 = vpack.c.b16 %v265, %v264
    %v280 = vpack.c.b16 %v267, %v266
    %v281 = vpack.c.b16 %v269, %v268
    %v282 = vpack.c.b16 %v271, %v270
    %v283 = vpack.c.b16 %v273, %v272
    %v284 = vpack.c.b16 %v275, %v274
    %v285 = vpack.c.b16 %v277, %v276
    %294 = vmatprep.subr.bf16.mxu0 0
    %295 = vmatpush1.bf16.msra.mxu0 %v278
    %296 = vmatprep.subr.bf16.mxu0 0
    %297 = vmatpush1.bf16.msra.mxu0 %v279
    %298 = vmatprep.subr.bf16.mxu0 0
    %299 = vmatpush1.bf16.msra.mxu0 %v280
    %300 = vmatprep.subr.bf16.mxu0 0
    %301 = vmatpush1.bf16.msra.mxu0 %v281
    %302 = vmatprep.subr.bf16.mxu0 0
    %303 = vmatpush1.bf16.msra.mxu0 %v282
    %304 = vmatprep.subr.bf16.mxu0 0
    %305 = vmatpush1.bf16.msra.mxu0 %v283
    %306 = vmatprep.subr.bf16.mxu0 0
    %307 = vmatpush1.bf16.msra.mxu0 %v284
    %308 = vmatprep.subr.bf16.mxu0 0
    %309 = vmatpush1.bf16.msra.mxu0 %v285
    %310 = vmatprep.subr.bf16.mxu0 0
    %311 = vmatpush1.bf16.msra.mxu0 0
    %312 = vmatprep.subr.bf16.mxu0 0
    %313 = vmatpush1.bf16.msra.mxu0 0
    %314 = vmatprep.subr.bf16.mxu0 0
    %315 = vmatpush1.bf16.msra.mxu0 0
    %316 = vmatprep.subr.bf16.mxu0 0
    %317 = vmatpush1.bf16.msra.mxu0 0
    %318 = vmatprep.subr.bf16.mxu0 0
    %319 = vmatpush1.bf16.msra.mxu0 0
    %320 = vmatprep.subr.bf16.mxu0 0
    %321 = vmatpush1.bf16.msra.mxu0 0
    %322 = vmatprep.subr.bf16.mxu0 0
    %323 = vmatpush1.bf16.msra.mxu0 0
    %324 = vmatprep.subr.bf16.mxu0 0
    %325 = vmatpush1.bf16.msra.mxu0 0
    %326 = vmatprep.mubr.bf16.mxu0 0
    %327 = vmatmul.mubr.bf16.gmra.mrb[0].mxu0 %v215
    %v328 = vpop.f32.mrb[0].mxu0
    %v329 = vadd.f32 %v244, %v328
    %v330 = vpop.f32.mrb[0].mxu0
    %v331 = vpop.f32.mrb[0].mxu0
    %v332 = vadd.f32 %v244, %v331
    %v333 = vpop.f32.mrb[0].mxu0
    %334 = vmatprep.mubr.bf16.mxu0 0
    %335 = vmatmul.mubr.bf16.gmra.mrb[0].mxu0 %v216
    %v336 = vpop.f32.mrb[0].mxu0
    %v337 = vadd.f32 %v244, %v336
    %v338 = vpop.f32.mrb[0].mxu0
    %v339 = vpop.f32.mrb[0].mxu0
    %v340 = vadd.f32 %v244, %v339
    %v341 = vpop.f32.mrb[0].mxu0
    %342 = vmatprep.mubr.bf16.mxu0 0
    %343 = vmatmul.mubr.bf16.gmra.mrb[0].mxu0 %v217
    %v344 = vpop.f32.mrb[0].mxu0
    %v345 = vadd.f32 %v244, %v344
    %v346 = vpop.f32.mrb[0].mxu0
    %v347 = vpop.f32.mrb[0].mxu0
    %v348 = vadd.f32 %v244, %v347
    %v349 = vpop.f32.mrb[0].mxu0
    %350 = vmatprep.mubr.bf16.mxu0 0
    %351 = vmatmul.mubr.bf16.gmra.mrb[0].mxu0 %v218
    %v352 = vpop.f32.mrb[0].mxu0
    %v353 = vadd.f32 %v244, %v352
    %v354 = vpop.f32.mrb[0].mxu0
    %v355 = vpop.f32.mrb[0].mxu0
    %v356 = vadd.f32 %v244, %v355
    %v357 = vpop.f32.mrb[0].mxu0
    %358 = vmatprep.mubr.bf16.mxu0 0
    %359 = vmatmul.mubr.bf16.gmra.mrb[0].mxu0 %v219
    %v360 = vpop.f32.mrb[0].mxu0
    %v361 = vadd.f32 %v244, %v360
    %v362 = vpop.f32.mrb[0].mxu0
    %v363 = vpop.f32.mrb[0].mxu0
    %v364 = vadd.f32 %v244, %v363
    %v365 = vpop.f32.mrb[0].mxu0
    %366 = vmatprep.mubr.bf16.mxu0 0
    %367 = vmatmul.mubr.bf16.gmra.mrb[0].mxu0 %v220
    %v368 = vpop.f32.mrb[0].mxu0
    %v369 = vadd.f32 %v244, %v368
    %v370 = vpop.f32.mrb[0].mxu0
    %v371 = vpop.f32.mrb[0].mxu0
    %v372 = vadd.f32 %v244, %v371
    %v373 = vpop.f32.mrb[0].mxu0
    %374 = vmatprep.mubr.bf16.mxu0 0
    %375 = vmatmul.mubr.bf16.gmra.mrb[0].mxu0 %v221
    %v376 = vpop.f32.mrb[0].mxu0
    %v377 = vadd.f32 %v244, %v376
    %v378 = vpop.f32.mrb[0].mxu0
    %v379 = vpop.f32.mrb[0].mxu0
    %v380 = vadd.f32 %v244, %v379
    %v381 = vpop.f32.mrb[0].mxu0
    %382 = vmatprep.mubr.bf16.mxu0 0
    %383 = vmatmul.mubr.bf16.gmra.mrb[0].mxu0 %v222
    %v384 = vpop.f32.mrb[0].mxu0
    %v385 = vadd.f32 %v244, %v384
    %v386 = vpop.f32.mrb[0].mxu0
    %v387 = vpop.f32.mrb[0].mxu0
    %v388 = vadd.f32 %v244, %v387
    %v389 = vpop.f32.mrb[0].mxu0
    %390 = vdwg.mxu0
    %v391 = vmax.f32 %v329, 0.0
    %v392 = vmax.f32 %v332, 0.0
    %v393 = vmax.f32 %v337, 0.0
    %v394 = vmax.f32 %v340, 0.0
    %v395 = vmax.f32 %v345, 0.0
    %v396 = vmax.f32 %v348, 0.0
    %v397 = vmax.f32 %v353, 0.0
    %v398 = vmax.f32 %v356, 0.0
    %v399 = vmax.f32 %v361, 0.0
    %v400 = vmax.f32 %v364, 0.0
    %v401 = vmax.f32 %v369, 0.0
    %v402 = vmax.f32 %v372, 0.0
    %v403 = vmax.f32 %v377, 0.0
    %v404 = vmax.f32 %v380, 0.0
    %v405 = vmax.f32 %v385, 0.0
    %v406 = vmax.f32 %v388, 0.0
    %v407 = vld [vmem:[%s5] sm:$0x1]
    %v409 = vlaneseq
    %v410 = vshrl.u32 %v409, 7
    %v411 = vsub.s32 0, %v410
    %v412 = vrot.slane %v407, %v411
    %v414 = vmul.f32 %v391, %v412
    %v415 = vmul.f32 %v392, %v412
    %v416 = vmul.f32 %v393, %v412
    %v417 = vmul.f32 %v394, %v412
    %v418 = vmul.f32 %v395, %v412
    %v419 = vmul.f32 %v396, %v412
    %v420 = vmul.f32 %v397, %v412
    %v421 = vmul.f32 %v398, %v412
    %v422 = vmul.f32 %v399, %v412
    %v423 = vmul.f32 %v400, %v412
    %v424 = vmul.f32 %v401, %v412
    %v425 = vmul.f32 %v402, %v412
    %v426 = vmul.f32 %v403, %v412
    %v427 = vmul.f32 %v404, %v412
    %v428 = vmul.f32 %v405, %v412
    %v429 = vmul.f32 %v406, %v412
    %430 = vxpose.xlu0.b32.start [1/16] %v414, 128
    %431 = vxpose.xlu0.b32.cont [2/16] %v415, 128
    %432 = vxpose.xlu0.b32.cont [3/16] %v416, 128
    %433 = vxpose.xlu0.b32.cont [4/16] %v417, 128
    %434 = vxpose.xlu0.b32.cont [5/16] %v418, 128
    %435 = vxpose.xlu0.b32.cont [6/16] %v419, 128
    %436 = vxpose.xlu0.b32.cont [7/16] %v420, 128
    %437 = vxpose.xlu0.b32.cont [8/16] %v421, 128
    %438 = vxpose.xlu0.b32.cont [9/16] %v422, 128
    %439 = vxpose.xlu0.b32.cont [10/16] %v423, 128
    %440 = vxpose.xlu0.b32.cont [11/16] %v424, 128
    %441 = vxpose.xlu0.b32.cont [12/16] %v425, 128
    %442 = vxpose.xlu0.b32.cont [13/16] %v426, 128
    %443 = vxpose.xlu0.b32.cont [14/16] %v427, 128
    %444 = vxpose.xlu0.b32.cont [15/16] %v428, 128
    %445 = vxpose.xlu0.b32.end [16/16] %v429, 128
    %v446 = vpop.trf.xlu0
    %v447 = vpop.trf.xlu0
    %v448 = vpop.trf.xlu0
    %v449 = vpop.trf.xlu0
    %v450 = vpop.trf.xlu0
    %v451 = vpop.trf.xlu0
    %v452 = vpop.trf.xlu0
    %v453 = vpop.trf.xlu0
    %v454 = vpop.trf.xlu0
    %v455 = vpop.trf.xlu0
    %v456 = vpop.trf.xlu0
    %v457 = vpop.trf.xlu0
    %v458 = vpop.trf.xlu0
    %v459 = vpop.trf.xlu0
    %v460 = vpop.trf.xlu0
    %v461 = vpop.trf.xlu0
    %v462 = vadd.f32 %v446, %v447
    %v463 = vadd.f32 %v462, %v448
    %v464 = vadd.f32 %v463, %v449
    %v465 = vadd.f32 %v464, %v450
    %v466 = vadd.f32 %v465, %v451
    %v467 = vadd.f32 %v466, %v452
    %v468 = vadd.f32 %v467, %v453
    %v469 = vadd.f32 %v468, %v454
    %v470 = vadd.f32 %v469, %v455
    %v471 = vadd.f32 %v470, %v456
    %v472 = vadd.f32 %v471, %v457
    %v473 = vadd.f32 %v472, %v458
    %v474 = vadd.f32 %v473, %v459
    %v475 = vadd.f32 %v474, %v460
    %v476 = vadd.f32 %v475, %v461
    %v477 = vrot.slane %v476, 4
    %v478 = vadd.f32 %v476, %v477
    %v479 = vrot.slane %v478, 2
    %v480 = vadd.f32 %v478, %v479
    %v481 = vrot.slane %v480, 1
    %v482 = vadd.f32 %v480, %v481
    %v483 = vld [vmem:[#allocation2] sm:$0x1]
    %485 = vset.pattern.permute.xlu0 0
    %486 = vperm.xlu0 %485, %v483
    %v487 = vpop.permute.xlu0 %486
    %v489 = vlaneseq
    %v490 = vshrl.u32 %v489, 7
    %v491 = vsub.s32 0, %v490
    %v492 = vrot.slane %v487, %v491
    %v493 = vadd.f32 %v482, %v492
    %494 = vst [vmem:[#allocation3] sm:$0x1] %v493
    // Predicated region
    $region30: #{tpu_custom_call.1} parent=1 // pred_check
      _
    $region31: #{tpu_custom_call.1} parent=1 // pred_check_branch
      %496 = sbr.rel (0) target = $region33
    $region32: #{tpu_custom_call.1} parent=1 // pred_region
      %s498 = ssub.s32 16, 16
      %499 = vsyncadd [#allocation4], %s498
      %s501 = sshll.u32 [#allocation3], 4
      %s502 = int_to_ptr.vmem [resolvable:$true] %s501
      %504 = dma.vmem_to_hbm [thread:$0]  %s502, 16, %s7, [#allocation4]
    $region33: #{tpu_custom_call.1} parent=1 // pred_fallthru
      _
    // Predicated region
    $region34: #{tpu_custom_call.1} parent=1 // pred_check
      _
    $region35: #{tpu_custom_call.1} parent=1 // pred_check_branch
      %506 = sbr.rel (0) target = $region37
    $region36: #{tpu_custom_call.1} parent=1 // pred_region
      %507 = dma.done [#allocation4], 16
    $region37: #{tpu_custom_call.1} parent=1 // pred_fallthru
      _
    %508 = vsyncpa [#allocation4], 1

</llo_original>
